<compile_context>
chip_gen: v5e
topology: v5e:2x2
jax: 0.10.0
libtpu: 0.0.40
codegen_flags: <defaults>
</compile_context>

<pallas_src>
import jax
import jax.numpy as jnp
from jax.experimental import pallas as pl
from jax.experimental.pallas import tpu as pltpu


def _link_predictor_kernel(zs_ref, zd_ref, ws_ref, wd_ref, b_ref, wf_ref,
                           bf_ref, out_ref):
    # Two fused linears; MXU with f32 accumulation regardless of input dtype.
    h = jnp.dot(zs_ref[...], ws_ref[...], preferred_element_type=jnp.float32)
    h = h + jnp.dot(zd_ref[...], wd_ref[...], preferred_element_type=jnp.float32)
    # Bias + ReLU epilogue stays f32 (v5e VPU has no bf16 ALU).
    h = h + b_ref[...]            # merged bias (b_src + b_dst), broadcast over rows
    h = jnp.maximum(h, 0.0)

    # Final projection: (1, C) . (tm, C)^T -> (1, tm) lane-dense row (avoids a
    # masked 1-lane-wide column store; the M=1 MXU push is free in an HBM-bound
    # kernel).
    row = jax.lax.dot_general(
        wf_ref[...], h,
        dimension_numbers=(((1,), (1,)), ((), ())),
        preferred_element_type=jnp.float32)
    row = row + bf_ref[0]         # scalar final bias from SMEM
    out_ref[...] = row.reshape(out_ref.shape).astype(out_ref.dtype)


def _round_up(x, m):
    return ((x + m - 1) // m) * m


def _choose_tm(n, c, itemsize):
    """Pick the batch tile size."""
    # Target >= ~2 MiB streamed per input per grid step; cap at 4096 rows so
    # double-buffered activations stay <= ~2 x 2 x 2 MiB of VMEM.
    tm = max(512, (2 * 1024 * 1024) // max(1, c * itemsize))
    tm = min(tm, 4096)
    tm = max(8, (tm // 8) * 8)
    if tm >= n:
        if n >= 1024:
            # Big batch that would fit in one tile: split into 2 balanced tiles
            # so the "parallel" grid axis populates both v7x TensorCores.
            tm = _round_up(pl.cdiv(n, 2), 8)
        else:
            tm = n          # tiny batch: single full-array block
    return tm


def _const_spec(shape, single_buffer):
    """BlockSpec for a grid-invariant (weight/bias) operand."""
    index_map = lambda i: (0,) * len(shape)
    if single_buffer and hasattr(pl, "Buffered"):
        try:
            # Constant index_map => double-buffering is pure VMEM waste.
            return pl.BlockSpec(shape, index_map, pipeline_mode=pl.Buffered(1))
        except TypeError:
            pass
    return pl.BlockSpec(shape, index_map)


def link_predictor(z_src, z_dst, params, *, tm=None):
    """Forward pass of LinkPredictor.

    params (PyTorch Linear convention, y = x @ W.T + b):
      W_src [C,C], b_src [C], W_dst [C,C], b_dst [C], W_final [1,C], b_final [1].

    MXU inputs use z_src.dtype (pass bf16 activations, produced upstream, for a
    ~2x HBM win on v6e/v7x); accumulation and the bias/ReLU epilogue are f32.
    """
    N, C = z_src.shape
    assert z_dst.shape == (N, C)
    in_dtype = z_src.dtype
    out_dtype = in_dtype
    in_itemsize = jnp.dtype(in_dtype).itemsize

    # --- tile selection (no input padding; last tile may be partial) ---
    if tm is None:
        tm = _choose_tm(N, C, in_itemsize)
    tm = min(tm, N)                       # never a block taller than the array
    if tm < N and tm % 8 != 0:
        raise ValueError("tm must be a multiple of 8 (or >= N)")
    num_tiles = pl.cdiv(N, tm)

    # --- parameter prep (tiny, once per call) ---
    w_dtype = in_dtype                    # MXU input dtype matches activations
    w_itemsize = jnp.dtype(w_dtype).itemsize
    ws_t = params["W_src"].T.astype(w_dtype)                       # [C, C]
    wd_t = params["W_dst"].T.astype(w_dtype)                       # [C, C]
    b = (params["b_src"].astype(jnp.float32)
         + params["b_dst"].astype(jnp.float32)).reshape(1, C)      # merged bias
    wf = params["W_final"].astype(jnp.float32).reshape(1, C)       # [1, C]
    bf = params["b_final"].astype(jnp.float32).reshape(1)          # scalar (SMEM)

    # --- VMEM budgeting ---
    weights_db_bytes = 2 * 2 * C * C * w_itemsize                  # if double-buffered
    single_buffer_weights = weights_db_bytes > (4 << 20)           # only matters for big C
    wbuf = 1 if single_buffer_weights else 2
    act_bytes = 2 * 2 * tm * C * in_itemsize                       # 2 inputs x 2 buffers
    out_bytes = 2 * tm * jnp.dtype(out_dtype).itemsize
    wgt_bytes = 2 * wbuf * C * C * w_itemsize + wbuf * 2 * C * 4 * 2
    need = act_bytes + wgt_bytes + out_bytes
    vmem_limit = int(min(112 << 20, max(32 << 20, need + need // 4)))

    cost = pl.CostEstimate(
        flops=4 * N * C * C + 4 * N * C,
        transcendentals=0,
        bytes_accessed=(2 * N * C * in_itemsize
                        + 2 * C * C * w_itemsize
                        + N * jnp.dtype(out_dtype).itemsize),
    )

    out_tiles = pl.pallas_call(
        _link_predictor_kernel,
        out_shape=jax.ShapeDtypeStruct((num_tiles, 1, tm), out_dtype),
        grid_spec=pltpu.PrefetchScalarGridSpec(
            num_scalar_prefetch=0,
            grid=(num_tiles,),
            in_specs=[
                pl.BlockSpec((tm, C), lambda i: (i, 0)),   # z_src tile (streamed)
                pl.BlockSpec((tm, C), lambda i: (i, 0)),   # z_dst tile (streamed)
                _const_spec((C, C), single_buffer_weights),  # W_src^T  (resident)
                _const_spec((C, C), single_buffer_weights),  # W_dst^T  (resident)
                _const_spec((1, C), single_buffer_weights),  # merged bias
                _const_spec((1, C), single_buffer_weights),  # W_final row
                pl.BlockSpec(memory_space=pltpu.MemorySpace.SMEM),  # b_final
            ],
            out_specs=pl.BlockSpec((1, 1, tm), lambda i: (i, 0, 0)),  # lane-dense row
        ),
        compiler_params=pltpu.CompilerParams(
            dimension_semantics=("parallel",),
            vmem_limit_bytes=vmem_limit),
        cost_estimate=cost,
    )(z_src, z_dst, ws_t, wd_t, b, wf, bf)

    # [num_tiles, 1, tm] -> [N, 1]; rows beyond N (partial last tile) are
    # row-independent garbage and are dropped here.
    return out_tiles.reshape(num_tiles * tm)[:N].reshape(N, 1)


def init_params(key, in_channels, dtype=jnp.float32):
    """Deterministic synthetic params with PyTorch Linear shapes."""
    k = jax.random.split(key, 6)
    scale = 1.0 / jnp.sqrt(in_channels)
    return {
        "W_src": (jax.random.uniform(k[0], (in_channels, in_channels),
                                     minval=-1, maxval=1) * scale).astype(dtype),
        "b_src": (jax.random.uniform(k[1], (in_channels,),
                                     minval=-1, maxval=1) * scale).astype(dtype),
        "W_dst": (jax.random.uniform(k[2], (in_channels, in_channels),
                                     minval=-1, maxval=1) * scale).astype(dtype),
        "b_dst": (jax.random.uniform(k[3], (in_channels,),
                                     minval=-1, maxval=1) * scale).astype(dtype),
        "W_final": (jax.random.uniform(k[4], (1, in_channels),
                                       minval=-1, maxval=1) * scale).astype(dtype),
        "b_final": (jax.random.uniform(k[5], (1,),
                                       minval=-1, maxval=1) * scale).astype(dtype),
    }


def _reference(z_src, z_dst, p):
    h = z_src @ p["W_src"].T + p["b_src"] + z_dst @ p["W_dst"].T + p["b_dst"]
    h = jnp.maximum(h, 0.0)
    return h @ p["W_final"].T + p["b_final"]


if __name__ == "__main__":
    # NOTE: at this toy size (N=20, C=32) a Pallas kernel cannot beat a fused
    # XLA dot; it is a correctness demo.  The kernel pays off for N in the
    # thousands (ideally C a multiple of 128).
    key = jax.random.PRNGKey(0)
    k_p, k_s, k_d = jax.random.split(key, 3)

    N, C = 20, 32
    params = init_params(k_p, C)
    z_src = jax.random.normal(k_s, (N, C), dtype=jnp.float32)
    z_dst = jax.random.normal(k_d, (N, C), dtype=jnp.float32)

    ref = _reference(z_src, z_dst, params)

    # tm=8 exercises the multi-step pipelined grid + un-padded ragged last tile.
    out = link_predictor(z_src, z_dst, params, tm=8)
    out = jax.block_until_ready(out)
    assert out.shape == (N, 1)
    assert jnp.allclose(out, ref, atol=1e-5, rtol=1e-5)

    # Default tile selection (single full-array block at this tiny size).
    out2 = jax.block_until_ready(link_predictor(z_src, z_dst, params))
    assert jnp.allclose(out2, ref, atol=1e-5, rtol=1e-5)

    print("KERNEL_OK")
</pallas_src>

<mosaic_0001>
module attributes {stable_mosaic.version = 11 : i64} {
  func.func @_link_predictor_kernel(%arg0: i32, %arg1: memref<8x32xf32, #tpu.memory_space<vmem>>, %arg2: memref<8x32xf32, #tpu.memory_space<vmem>>, %arg3: memref<32x32xf32, #tpu.memory_space<vmem>>, %arg4: memref<32x32xf32, #tpu.memory_space<vmem>>, %arg5: memref<1x32xf32, #tpu.memory_space<vmem>>, %arg6: memref<1x32xf32, #tpu.memory_space<vmem>>, %arg7: memref<1xf32, #tpu.memory_space<smem>>, %arg8: memref<1x1x8xf32, #tpu.memory_space<vmem>>) attributes {dimension_semantics = [#tpu.dimension_semantics<parallel>], iteration_bounds = array<i64: 3>, scalar_prefetch = 0 : i64, scratch_operands = 0 : i64, tpu.core_type = #tpu.core_type<tc>, window_params = [{transform_indices = @transform_0, window_bounds = array<i64: 8, 32>}, {transform_indices = @transform_1, window_bounds = array<i64: 8, 32>}, {pipeline_mode = #tpu.pipeline_mode<synchronous>, transform_indices = @transform_2, window_bounds = array<i64: 32, 32>}, {pipeline_mode = #tpu.pipeline_mode<synchronous>, transform_indices = @transform_3, window_bounds = array<i64: 32, 32>}, {pipeline_mode = #tpu.pipeline_mode<synchronous>, transform_indices = @transform_4, window_bounds = array<i64: 1, 32>}, {pipeline_mode = #tpu.pipeline_mode<synchronous>, transform_indices = @transform_5, window_bounds = array<i64: 1, 32>}, {transform_indices = @transform_6, window_bounds = array<i64: 1>}, {transform_indices = @transform_7, window_bounds = array<i64: 1, 1, 8>}]} {
    %c0 = arith.constant 0 : index
    %c0_0 = arith.constant 0 : index
    %0 = vector.load %arg1[%c0, %c0_0] : memref<8x32xf32, #tpu.memory_space<vmem>>, vector<8x32xf32>
    %c0_1 = arith.constant 0 : index
    %c0_2 = arith.constant 0 : index
    %1 = vector.load %arg3[%c0_1, %c0_2] : memref<32x32xf32, #tpu.memory_space<vmem>>, vector<32x32xf32>
    %cst = arith.constant dense<0.000000e+00> : vector<8x32xf32>
    %2 = tpu.matmul %0, %1, %cst {dimension_numbers = #tpu.dot_dimension_numbers<[1], [0], [0], [1], [0, 0, 1, 1], [], []>} : vector<8x32xf32>, vector<32x32xf32>, vector<8x32xf32> -> vector<8x32xf32>
    %c0_3 = arith.constant 0 : index
    %c0_4 = arith.constant 0 : index
    %3 = vector.load %arg2[%c0_3, %c0_4] : memref<8x32xf32, #tpu.memory_space<vmem>>, vector<8x32xf32>
    %c0_5 = arith.constant 0 : index
    %c0_6 = arith.constant 0 : index
    %4 = vector.load %arg4[%c0_5, %c0_6] : memref<32x32xf32, #tpu.memory_space<vmem>>, vector<32x32xf32>
    %cst_7 = arith.constant dense<0.000000e+00> : vector<8x32xf32>
    %5 = tpu.matmul %3, %4, %cst_7 {dimension_numbers = #tpu.dot_dimension_numbers<[1], [0], [0], [1], [0, 0, 1, 1], [], []>} : vector<8x32xf32>, vector<32x32xf32>, vector<8x32xf32> -> vector<8x32xf32>
    %6 = arith.addf %2, %5 : vector<8x32xf32>
    %c0_8 = arith.constant 0 : index
    %c0_9 = arith.constant 0 : index
    %7 = vector.load %arg5[%c0_8, %c0_9] : memref<1x32xf32, #tpu.memory_space<vmem>>, vector<1x32xf32>
    %8 = vector.broadcast %7 : vector<1x32xf32> to vector<8x32xf32>
    %9 = arith.addf %6, %8 : vector<8x32xf32>
    %cst_10 = arith.constant 0.000000e+00 : f32
    %10 = vector.broadcast %cst_10 : f32 to vector<8x32xf32>
    %11 = arith.maximumf %9, %10 : vector<8x32xf32>
    %c0_11 = arith.constant 0 : index
    %c0_12 = arith.constant 0 : index
    %12 = vector.load %arg6[%c0_11, %c0_12] : memref<1x32xf32, #tpu.memory_space<vmem>>, vector<1x32xf32>
    %cst_13 = arith.constant dense<0.000000e+00> : vector<1x8xf32>
    %13 = tpu.matmul %12, %11, %cst_13 {dimension_numbers = #tpu.dot_dimension_numbers<[1], [1], [0], [0], [0, 0, 1, 0], [], []>} : vector<1x32xf32>, vector<8x32xf32>, vector<1x8xf32> -> vector<1x8xf32>
    %c0_14 = arith.constant 0 : index
    %14 = memref.load %arg7[%c0_14] : memref<1xf32, #tpu.memory_space<smem>>
    %15 = vector.broadcast %14 : f32 to vector<1x8xf32>
    %16 = arith.addf %13, %15 : vector<1x8xf32>
    %17 = vector.shape_cast %16 : vector<1x8xf32> to vector<1x1x8xf32>
    %c0_15 = arith.constant 0 : index
    %c0_16 = arith.constant 0 : index
    %c0_17 = arith.constant 0 : index
    %18 = vector.load %arg8[%c0_15, %c0_16, %c0_17] : memref<1x1x8xf32, #tpu.memory_space<vmem>>, vector<1x1x8xf32>
    tpu.vector_store %arg8[%c0_15, %c0_16, %c0_17], %17 {strides = array<i32>} : memref<1x1x8xf32, #tpu.memory_space<vmem>>, vector<1x1x8xf32>,
    return
  }
  func.func @transform_0(%arg0: i32) -> (i32, i32) {
    %c0_i32 = arith.constant 0 : i32
    %c0_i32_0 = arith.constant 0 : i32
    return %arg0, %c0_i32 : i32, i32
  }
  func.func @transform_1(%arg0: i32) -> (i32, i32) {
    %c0_i32 = arith.constant 0 : i32
    %c0_i32_0 = arith.constant 0 : i32
    return %arg0, %c0_i32 : i32, i32
  }
  func.func @transform_2(%arg0: i32) -> (i32, i32) {
    %c0_i32 = arith.constant 0 : i32
    %c0_i32_0 = arith.constant 0 : i32
    %c0_i32_1 = arith.constant 0 : i32
    return %c0_i32, %c0_i32_0 : i32, i32
  }
  func.func @transform_3(%arg0: i32) -> (i32, i32) {
    %c0_i32 = arith.constant 0 : i32
    %c0_i32_0 = arith.constant 0 : i32
    %c0_i32_1 = arith.constant 0 : i32
    return %c0_i32, %c0_i32_0 : i32, i32
  }
  func.func @transform_4(%arg0: i32) -> (i32, i32) {
    %c0_i32 = arith.constant 0 : i32
    %c0_i32_0 = arith.constant 0 : i32
    %c0_i32_1 = arith.constant 0 : i32
    return %c0_i32, %c0_i32_0 : i32, i32
  }
  func.func @transform_5(%arg0: i32) -> (i32, i32) {
    %c0_i32 = arith.constant 0 : i32
    %c0_i32_0 = arith.constant 0 : i32
    %c0_i32_1 = arith.constant 0 : i32
    return %c0_i32, %c0_i32_0 : i32, i32
  }
  func.func @transform_6(%arg0: i32) -> i32 {
    %c0_i32 = arith.constant 0 : i32
    %c0_i32_0 = arith.constant 0 : i32
    return %c0_i32 : i32
  }
  func.func @transform_7(%arg0: i32) -> (i32, i32, i32) {
    %c0_i32 = arith.constant 0 : i32
    %c0_i32_0 = arith.constant 0 : i32
    %c0_i32_1 = arith.constant 0 : i32
    return %arg0, %c0_i32, %c0_i32_0 : i32, i32, i32
  }
}

</mosaic_0001>

<llo_original>
// kernel: tpu_custom_call.1
$region0: #{tpu_custom_call.1}
  #allocation0 [shape = 'u32[]', space=smem, size = 0x4, offset = 0x4, fixed_abs, tag = 'smem constant byte address 0x4 - core index']
  #allocation1 [shape = 'u32[72,128]{1,0:T(1,128)}', space=vmem, size = 0x9000, scoped, tag = 'internal scratch']
  #allocation2 [shape = 'f32[1]{0:T(128)S(6)}', space=smem, size = 0x200, scoped, tag = 'scoped memory for tpu_custom_call.1']
  %s0 = inlined_call_operand.hbm [shape: f32[20,32], index: 0, kind: input, shape index: {}]
  %s1 = inlined_call_operand.hbm [shape: f32[20,32], index: 1, kind: input, shape index: {}]
  %s2 = inlined_call_operand.hbm [shape: f32[32,32], index: 2, kind: input, shape index: {}]
  %s3 = inlined_call_operand.hbm [shape: f32[32,32], index: 3, kind: input, shape index: {}]
  %s4 = inlined_call_operand.vmem [shape: f32[1,32], index: 4, kind: input, shape index: {}]
  %s5 = inlined_call_operand.vmem [shape: f32[1,32], index: 5, kind: input, shape index: {}]
  %s6 = inlined_call_operand.<no memory space> [shape: f32[1], index: 6, kind: input, shape index: {}]
  %s7 = inlined_call_operand.hbm [shape: f32[3,1,8], index: 7, kind: output, shape index: {}]
  %s8 = sld [smem:[#allocation0]]
  $region77: #{tpu_custom_call.1} parent=0
    _
  %s10 = ssub.s32 1, %s8
  %s11 = scalar_select 0, %s10, %s8
  %12 = sst [smem:[#allocation2]] %s6
  $region1: #{tpu_custom_call.1} parent=0
    #allocation3 [shape = 'u8[8192]{0}', space=vmem, size = 0x2000, scoped, tag = 'input window, operand 0']
    #allocation4 [shape = 's32[2]{0}', space=sflag, size = 0x8, scoped, tag = 'scoped memory for tpu_custom_call.1']
    #allocation5 [shape = 's32[2]{0}', space=sflag, size = 0x8, scoped, tag = 'scoped memory for tpu_custom_call.1']
    #allocation6 [shape = 'u8[8192]{0}', space=vmem, size = 0x2000, scoped, tag = 'input window, operand 1']
    #allocation7 [shape = 's32[2]{0}', space=sflag, size = 0x8, scoped, tag = 'scoped memory for tpu_custom_call.1']
    #allocation8 [shape = 'u8[16384]{0}', space=vmem, size = 0x4000, scoped, tag = 'input window, operand 2, single buffered']
    #allocation9 [shape = 'u8[16384]{0}', space=vmem, size = 0x4000, scoped, tag = 'input window, operand 3, single buffered']
    #allocation10 [shape = 's32[1]{0}', space=sflag, size = 0x4, scoped, tag = 'scoped memory for tpu_custom_call.1']
    #allocation11 [shape = 'u8[1024]{0}', space=vmem, size = 0x400, scoped, tag = 'output window, operand 0']
    %13 = vsyncpa [#allocation4], 0
    %s14 = scalar_lea.sflag [#allocation4], 1
    %15 = vsyncpa %s14, 0
    %16 = vsyncpa [#allocation7], 0
    %s17 = scalar_lea.sflag [#allocation7], 1
    %18 = vsyncpa %s17, 0
    %19 = vsyncpa [#allocation10], 0
    %20 = vsyncpa [#allocation5], 0
    %s21 = scalar_lea.sflag [#allocation5], 1
    %22 = vsyncpa %s21, 0
    loop: start=0, step=1, limit=5
    $region2: #{tpu_custom_call.1} parent=1 // loop_pre_header
      _
    $region3: #{tpu_custom_call.1} parent=1 // loop_header
      %s24 = sphi 0, %s28
      %p25 = scmp.ge.s32.totalorder %s24, 5
      %s34 = sphi 0, %s36
      %s37 = sphi 0, %s34
      %s38 = sphi 0, %s37
      %s54 = sphi 0, %s38
      %s60 = sphi 0, %s62
      %s63 = sphi 0, %s60
      %s64 = sphi 0, %s63
      %s80 = sphi 0, %s64
      %s84 = sphi 0, %s84
      %s86 = sphi 0, %s84
      %s87 = sphi 0, %s86
      %s101 = sphi 0, %s87
      %s105 = sphi 0, %s105
      %s107 = sphi 0, %s105
      %s108 = sphi 0, %s107
      %s122 = sphi 0, %s108
      %s126 = sphi 0, %s126
      %s128 = sphi 0, %s126
      %s129 = sphi 0, %s128
      %s143 = sphi 0, %s129
      %s147 = sphi 0, %s147
      %s149 = sphi 0, %s147
      %s150 = sphi 0, %s149
      %s164 = sphi 0, %s150
      %s168 = sphi 0, %s168
      %s170 = sphi 0, %s168
      %s171 = sphi 0, %s170
      %s185 = sphi 0, %s171
      %s191 = sphi 0, %s193
      %s194 = sphi 0, %s191
      %s195 = sphi 0, %s194
      %s211 = sphi 0, %s195
    $region4: #{tpu_custom_call.1} parent=1 // loop_header_branch
      %27 = sbr.rel (%p25) target = $region8
    $region5: #{tpu_custom_call.1} parent=1 // loop_body
      %s29 = ssub.s32 %s24, 1
      %s30 = ssub.s32 %s24, 2
      %s31 = sadd.s32 %s24, 1
      %s32 = ssub.s32 %s24, %s31
      %p33 = scmp.eq.s32.totalorder %s32, 0
      %s35 = sadd.s32 %s34, 1
      %s36 = scalar_select %p33, %s34, %s35
      %p39 = pneg %p33
      %p40 = scmp.eq.s32.totalorder %s24, 2
      %p41 = por %p39, %p40
      %p42 = scmp.ne.s32.totalorder %s34, %s37
      %p43 = scmp.eq.s32.totalorder %s24, 0
      %p44 = por %p42, %p43
      %p45 = scmp.ne.s32.totalorder %s34, %s37
      %p46 = scmp.eq.s32.totalorder %s29, 2
      %p47 = por %p45, %p46
      %p48 = scmp.ne.s32.totalorder %s37, %s38
      %p49 = scmp.eq.s32.totalorder %s29, 0
      %p50 = por %p48, %p49
      %p51 = scmp.ne.s32.totalorder %s37, %s38
      %p52 = scmp.eq.s32.totalorder %s30, 2
      %p53 = por %p51, %p52
      %p55 = scmp.ne.s32.totalorder %s38, %s54
      %p56 = scmp.eq.s32.totalorder %s30, 0
      %p57 = por %p55, %p56
      %s58 = ssub.s32 %s24, %s31
      %p59 = scmp.eq.s32.totalorder %s58, 0
      %s61 = sadd.s32 %s60, 1
      %s62 = scalar_select %p59, %s60, %s61
      %p65 = pneg %p59
      %p66 = scmp.eq.s32.totalorder %s24, 2
      %p67 = por %p65, %p66
      %p68 = scmp.ne.s32.totalorder %s60, %s63
      %p69 = scmp.eq.s32.totalorder %s24, 0
      %p70 = por %p68, %p69
      %p71 = scmp.ne.s32.totalorder %s60, %s63
      %p72 = scmp.eq.s32.totalorder %s29, 2
      %p73 = por %p71, %p72
      %p74 = scmp.ne.s32.totalorder %s63, %s64
      %p75 = scmp.eq.s32.totalorder %s29, 0
      %p76 = por %p74, %p75
      %p77 = scmp.ne.s32.totalorder %s63, %s64
      %p78 = scmp.eq.s32.totalorder %s30, 2
      %p79 = por %p77, %p78
      %p81 = scmp.ne.s32.totalorder %s64, %s80
      %p82 = scmp.eq.s32.totalorder %s30, 0
      %p83 = por %p81, %p82
      %s85 = sadd.s32 %s84, 1
      %p88 = scmp.eq.s32.totalorder %s24, 2
      %p89 = scmp.ne.s32.totalorder %s84, %s86
      %p90 = scmp.eq.s32.totalorder %s24, 0
      %p91 = por %p89, %p90
      %p92 = scmp.ne.s32.totalorder %s84, %s86
      %p93 = scmp.eq.s32.totalorder %s29, 2
      %p94 = por %p92, %p93
      %p95 = scmp.ne.s32.totalorder %s86, %s87
      %p96 = scmp.eq.s32.totalorder %s29, 0
      %p97 = por %p95, %p96
      %p98 = scmp.ne.s32.totalorder %s86, %s87
      %p99 = scmp.eq.s32.totalorder %s30, 2
      %p100 = por %p98, %p99
      %p102 = scmp.ne.s32.totalorder %s87, %s101
      %p103 = scmp.eq.s32.totalorder %s30, 0
      %p104 = por %p102, %p103
      %s106 = sadd.s32 %s105, 1
      %p109 = scmp.eq.s32.totalorder %s24, 2
      %p110 = scmp.ne.s32.totalorder %s105, %s107
      %p111 = scmp.eq.s32.totalorder %s24, 0
      %p112 = por %p110, %p111
      %p113 = scmp.ne.s32.totalorder %s105, %s107
      %p114 = scmp.eq.s32.totalorder %s29, 2
      %p115 = por %p113, %p114
      %p116 = scmp.ne.s32.totalorder %s107, %s108
      %p117 = scmp.eq.s32.totalorder %s29, 0
      %p118 = por %p116, %p117
      %p119 = scmp.ne.s32.totalorder %s107, %s108
      %p120 = scmp.eq.s32.totalorder %s30, 2
      %p121 = por %p119, %p120
      %p123 = scmp.ne.s32.totalorder %s108, %s122
      %p124 = scmp.eq.s32.totalorder %s30, 0
      %p125 = por %p123, %p124
      %s127 = sadd.s32 %s126, 1
      %p130 = scmp.eq.s32.totalorder %s24, 2
      %p131 = scmp.ne.s32.totalorder %s126, %s128
      %p132 = scmp.eq.s32.totalorder %s24, 0
      %p133 = por %p131, %p132
      %p134 = scmp.ne.s32.totalorder %s126, %s128
      %p135 = scmp.eq.s32.totalorder %s29, 2
      %p136 = por %p134, %p135
      %p137 = scmp.ne.s32.totalorder %s128, %s129
      %p138 = scmp.eq.s32.totalorder %s29, 0
      %p139 = por %p137, %p138
      %p140 = scmp.ne.s32.totalorder %s128, %s129
      %p141 = scmp.eq.s32.totalorder %s30, 2
      %p142 = por %p140, %p141
      %p144 = scmp.ne.s32.totalorder %s129, %s143
      %p145 = scmp.eq.s32.totalorder %s30, 0
      %p146 = por %p144, %p145
      %s148 = sadd.s32 %s147, 1
      %p151 = scmp.eq.s32.totalorder %s24, 2
      %p152 = scmp.ne.s32.totalorder %s147, %s149
      %p153 = scmp.eq.s32.totalorder %s24, 0
      %p154 = por %p152, %p153
      %p155 = scmp.ne.s32.totalorder %s147, %s149
      %p156 = scmp.eq.s32.totalorder %s29, 2
      %p157 = por %p155, %p156
      %p158 = scmp.ne.s32.totalorder %s149, %s150
      %p159 = scmp.eq.s32.totalorder %s29, 0
      %p160 = por %p158, %p159
      %p161 = scmp.ne.s32.totalorder %s149, %s150
      %p162 = scmp.eq.s32.totalorder %s30, 2
      %p163 = por %p161, %p162
      %p165 = scmp.ne.s32.totalorder %s150, %s164
      %p166 = scmp.eq.s32.totalorder %s30, 0
      %p167 = por %p165, %p166
      %s169 = sadd.s32 %s168, 1
      %p172 = scmp.eq.s32.totalorder %s24, 2
      %p173 = scmp.ne.s32.totalorder %s168, %s170
      %p174 = scmp.eq.s32.totalorder %s24, 0
      %p175 = por %p173, %p174
      %p176 = scmp.ne.s32.totalorder %s168, %s170
      %p177 = scmp.eq.s32.totalorder %s29, 2
      %p178 = por %p176, %p177
      %p179 = scmp.ne.s32.totalorder %s170, %s171
      %p180 = scmp.eq.s32.totalorder %s29, 0
      %p181 = por %p179, %p180
      %p182 = scmp.ne.s32.totalorder %s170, %s171
      %p183 = scmp.eq.s32.totalorder %s30, 2
      %p184 = por %p182, %p183
      %p186 = scmp.ne.s32.totalorder %s171, %s185
      %p187 = scmp.eq.s32.totalorder %s30, 0
      %p188 = por %p186, %p187
      %s189 = ssub.s32 %s24, %s31
      %p190 = scmp.eq.s32.totalorder %s189, 0
      %s192 = sadd.s32 %s191, 1
      %s193 = scalar_select %p190, %s191, %s192
      %p196 = pneg %p190
      %p197 = scmp.eq.s32.totalorder %s24, 2
      %p198 = por %p196, %p197
      %p199 = scmp.ne.s32.totalorder %s191, %s194
      %p200 = scmp.eq.s32.totalorder %s24, 0
      %p201 = por %p199, %p200
      %p202 = scmp.ne.s32.totalorder %s191, %s194
      %p203 = scmp.eq.s32.totalorder %s29, 2
      %p204 = por %p202, %p203
      %p205 = scmp.ne.s32.totalorder %s194, %s195
      %p206 = scmp.eq.s32.totalorder %s29, 0
      %p207 = por %p205, %p206
      %p208 = scmp.ne.s32.totalorder %s194, %s195
      %p209 = scmp.eq.s32.totalorder %s30, 2
      %p210 = por %p208, %p209
      %p212 = scmp.ne.s32.totalorder %s195, %s211
      %p213 = scmp.eq.s32.totalorder %s30, 0
      %p214 = por %p212, %p213
      %p215 = scmp.le.s32.totalorder 1, %s24
      %p216 = scmp.lt.s32.totalorder %s24, 4
      %p217 = pnand %p215, %p216
      %p218 = pneg %p217
      // Predicated region
      $region9: #{tpu_custom_call.1} parent=5 // pred_check
        _
      $region10: #{tpu_custom_call.1} parent=5 // pred_check_branch
        %220 = sbr.rel (%p217) target = $region12
      $region11: #{tpu_custom_call.1} parent=5 // pred_region
        %s221 = ssub.s32 %s24, 1
        // Predicated region
        $region13: #{tpu_custom_call.1} parent=11 // pred_check
          %p222 = pneg %p97
        $region14: #{tpu_custom_call.1} parent=11 // pred_check_branch
          %224 = sbr.rel (%p222) target = $region16
        $region15: #{tpu_custom_call.1} parent=11 // pred_region
          %226 = vsyncadd [#allocation7], 0
          %s227 = sshll.u32 %s2, 4
          %s228 = int_to_ptr.hbm [resolvable:$true] %s227
          %s229 = sshll.u32 [#allocation8], 4
          %s230 = int_to_ptr.vmem [resolvable:$true] %s229
          %235 = dma.hbm_to_vmem [thread:$0]  %s228, 512, %s230, [#allocation7], 128, 128, 8
        $region16: #{tpu_custom_call.1} parent=11 // pred_fallthru
          _
        // Predicated region
        $region17: #{tpu_custom_call.1} parent=11 // pred_check
          %p236 = pneg %p118
        $region18: #{tpu_custom_call.1} parent=11 // pred_check_branch
          %238 = sbr.rel (%p236) target = $region20
        $region19: #{tpu_custom_call.1} parent=11 // pred_region
          %240 = vsyncadd [#allocation10], 0
          %s241 = sshll.u32 %s3, 4
          %s242 = int_to_ptr.hbm [resolvable:$true] %s241
          %s243 = sshll.u32 [#allocation9], 4
          %s244 = int_to_ptr.vmem [resolvable:$true] %s243
          %249 = dma.hbm_to_vmem [thread:$0]  %s242, 512, %s244, [#allocation10], 128, 128, 8
        $region20: #{tpu_custom_call.1} parent=11 // pred_fallthru
          _
        // Predicated region
        $region21: #{tpu_custom_call.1} parent=11 // pred_check
          %p250 = pneg %p139
        $region22: #{tpu_custom_call.1} parent=11 // pred_check_branch
          %252 = sbr.rel (%p250) target = $region24
        $region23: #{tpu_custom_call.1} parent=11 // pred_region
          _
        $region24: #{tpu_custom_call.1} parent=11 // pred_fallthru
          _
        // Predicated region
        $region25: #{tpu_custom_call.1} parent=11 // pred_check
          %p253 = pneg %p160
        $region26: #{tpu_custom_call.1} parent=11 // pred_check_branch
          %255 = sbr.rel (%p253) target = $region28
        $region27: #{tpu_custom_call.1} parent=11 // pred_region
          _
        $region28: #{tpu_custom_call.1} parent=11 // pred_fallthru
          _
        // Predicated region
        $region29: #{tpu_custom_call.1} parent=11 // pred_check
          %p256 = pneg %p181
        $region30: #{tpu_custom_call.1} parent=11 // pred_check_branch
          %258 = sbr.rel (%p256) target = $region32
        $region31: #{tpu_custom_call.1} parent=11 // pred_region
          _
        $region32: #{tpu_custom_call.1} parent=11 // pred_fallthru
          _
      $region12: #{tpu_custom_call.1} parent=5 // pred_fallthru
        _
      %p259 = scmp.lt.s32.totalorder %s24, 3
      // Predicated region
      $region33: #{tpu_custom_call.1} parent=5 // pred_check
        %p260 = pneg %p259
      $region34: #{tpu_custom_call.1} parent=5 // pred_check_branch
        %262 = sbr.rel (%p260) target = $region36
      $region35: #{tpu_custom_call.1} parent=5 // pred_region
        // Predicated region
        $region37: #{tpu_custom_call.1} parent=35 // pred_check
          %p263 = pneg %p44
        $region38: #{tpu_custom_call.1} parent=35 // pred_check_branch
          %265 = sbr.rel (%p263) target = $region40
        $region39: #{tpu_custom_call.1} parent=35 // pred_region
          %s266 = sand.u32 %s34, 1
          %s267 = scalar_lea.sflag [#allocation4], %s266
          %s268 = sand.u32 %s34, 1
          %s269 = smul.addr %s268, 8
          %s270 = scalar_lea.vmem [#allocation3], %s269
          %272 = vsyncadd %s267, 0
          %s273 = smul.addr %s24, 8
          %s274 = scalar_lea.hbm %s0, %s273
          %s276 = sshll.u32 %s274, 4
          %s277 = int_to_ptr.hbm [resolvable:$true] %s276
          %s278 = sshll.u32 %s270, 4
          %s279 = int_to_ptr.vmem [resolvable:$true] %s278
          %281 = dma.hbm_to_vmem [thread:$0]  %s277, 128, %s279, %s267
        $region40: #{tpu_custom_call.1} parent=35 // pred_fallthru
          _
        // Predicated region
        $region41: #{tpu_custom_call.1} parent=35 // pred_check
          %p282 = pneg %p70
        $region42: #{tpu_custom_call.1} parent=35 // pred_check_branch
          %284 = sbr.rel (%p282) target = $region44
        $region43: #{tpu_custom_call.1} parent=35 // pred_region
          %s285 = sand.u32 %s24, 1
          %s286 = scalar_lea.sflag [#allocation7], %s285
          %s287 = sand.u32 %s60, 1
          %s288 = smul.addr %s287, 8
          %s289 = scalar_lea.vmem [#allocation6], %s288
          %291 = vsyncadd %s286, 0
          %s292 = smul.addr %s24, 8
          %s293 = scalar_lea.hbm %s1, %s292
          %s295 = sshll.u32 %s293, 4
          %s296 = int_to_ptr.hbm [resolvable:$true] %s295
          %s297 = sshll.u32 %s289, 4
          %s298 = int_to_ptr.vmem [resolvable:$true] %s297
          %300 = dma.hbm_to_vmem [thread:$0]  %s296, 128, %s298, %s286
        $region44: #{tpu_custom_call.1} parent=35 // pred_fallthru
          _
      $region36: #{tpu_custom_call.1} parent=5 // pred_fallthru
        _
      %p301 = scmp.le.s32.totalorder 1, %s24
      %p302 = scmp.lt.s32.totalorder %s24, 4
      %p303 = pnand %p301, %p302
      %p304 = pneg %p303
      // Predicated region
      $region45: #{tpu_custom_call.1} parent=5 // pred_check
        _
      $region46: #{tpu_custom_call.1} parent=5 // pred_check_branch
        %306 = sbr.rel (%p303) target = $region48
      $region47: #{tpu_custom_call.1} parent=5 // pred_region
        %s307 = ssub.s32 %s24, 1
        %s308 = sand.u32 %s37, 1
        %s309 = scalar_lea.sflag [#allocation4], %s308
        %s310 = sand.u32 %s37, 1
        %s311 = smul.addr %s310, 8
        %s312 = scalar_lea.vmem [#allocation3], %s311
        // Predicated region
        $region49: #{tpu_custom_call.1} parent=47 // pred_check
          %p313 = pneg %p50
        $region50: #{tpu_custom_call.1} parent=47 // pred_check_branch
          %315 = sbr.rel (%p313) target = $region52
        $region51: #{tpu_custom_call.1} parent=47 // pred_region
          %317 = dma.done %s309, 128
        $region52: #{tpu_custom_call.1} parent=47 // pred_fallthru
          _
        %s318 = sand.u32 %s29, 1
        %s319 = scalar_lea.sflag [#allocation7], %s318
        %s320 = sand.u32 %s63, 1
        %s321 = smul.addr %s320, 8
        %s322 = scalar_lea.vmem [#allocation6], %s321
        // Predicated region
        $region53: #{tpu_custom_call.1} parent=47 // pred_check
          %p323 = pneg %p76
        $region54: #{tpu_custom_call.1} parent=47 // pred_check_branch
          %325 = sbr.rel (%p323) target = $region56
        $region55: #{tpu_custom_call.1} parent=47 // pred_region
          %327 = dma.done %s319, 128
        $region56: #{tpu_custom_call.1} parent=47 // pred_fallthru
          _
        // Predicated region
        $region57: #{tpu_custom_call.1} parent=47 // pred_check
          %p328 = pneg %p97
        $region58: #{tpu_custom_call.1} parent=47 // pred_check_branch
          %330 = sbr.rel (%p328) target = $region60
        $region59: #{tpu_custom_call.1} parent=47 // pred_region
          %332 = dma.done [#allocation7], 512
        $region60: #{tpu_custom_call.1} parent=47 // pred_fallthru
          _
        // Predicated region
        $region61: #{tpu_custom_call.1} parent=47 // pred_check
          %p333 = pneg %p118
        $region62: #{tpu_custom_call.1} parent=47 // pred_check_branch
          %335 = sbr.rel (%p333) target = $region64
        $region63: #{tpu_custom_call.1} parent=47 // pred_region
          %337 = dma.done [#allocation10], 512
        $region64: #{tpu_custom_call.1} parent=47 // pred_fallthru
          _
        %s338 = sand.u32 %s37, 1
        %s339 = scalar_lea.sflag [#allocation4], %s338
        %s340 = sand.u32 %s37, 1
        %s341 = smul.addr %s340, 8
        %s342 = scalar_lea.vmem [#allocation3], %s341
        %p343 = pneg %p50
        %p344 = pneg %p47
        %s345 = sand.u32 %s29, 1
        %s346 = scalar_lea.sflag [#allocation7], %s345
        %s347 = sand.u32 %s63, 1
        %s348 = smul.addr %s347, 8
        %s349 = scalar_lea.vmem [#allocation6], %s348
        %p350 = pneg %p76
        %p351 = pneg %p73
        %p352 = pneg %p97
        %p353 = pneg %p94
        %p354 = pneg %p118
        %p355 = pneg %p115
        %p356 = pneg %p139
        %p357 = pneg %p136
        %p358 = pneg %p160
        %p359 = pneg %p157
        %p360 = pneg %p181
        %p361 = pneg %p178
        %p362 = pneg %p207
        %p363 = pneg %p204
        %s364 = sand.u32 %s194, 1
        %s365 = scalar_lea.sflag [#allocation5], %s364
        %s366 = sand.u32 %s194, 1
        %s367 = scalar_lea.vmem [#allocation11], %s366
        %v368 = vld [vmem:[%s312] sm:$0xff]
        %v369 = vld [vmem:[#allocation8] sm:$0xff]
        %v370 = vld [vmem:[#allocation8 + $0x8] sm:$0xff]
        %v371 = vld [vmem:[#allocation8 + $0x10] sm:$0xff]
        %v372 = vld [vmem:[#allocation8 + $0x18] sm:$0xff]
        %v373 = vld [vmem:[%s322] sm:$0xff]
        %v374 = vld [vmem:[#allocation9] sm:$0xff]
        %v375 = vld [vmem:[#allocation9 + $0x8] sm:$0xff]
        %v376 = vld [vmem:[#allocation9 + $0x10] sm:$0xff]
        %v377 = vld [vmem:[#allocation9 + $0x18] sm:$0xff]
        %vm378 = vcmask 261120
        %v380 = vsel %vm378, %v373, 0
        %382 = vmatpush.msra.mxu0 0.0
        %383 = vmatpush.msra.mxu0 0.0
        %384 = vmatpush.msra.mxu0 0.0
        %385 = vmatpush.msra.mxu0 0.0
        %386 = vmatpush.msra.mxu0 0.0
        %387 = vmatpush.msra.mxu0 0.0
        %388 = vmatpush.msra.mxu0 0.0
        %389 = vmatpush.msra.mxu0 0.0
        %390 = vmatpush.msra.mxu0 0.0
        %391 = vmatpush.msra.mxu0 0.0
        %392 = vmatpush.msra.mxu0 0.0
        %393 = vmatpush.msra.mxu0 0.0
        %394 = vmatpush.msra.mxu0 %v377
        %395 = vmatpush.msra.mxu0 %v376
        %396 = vmatpush.msra.mxu0 %v375
        %397 = vmatpush.msra.mxu0 %v374
        %398 = vmatmul.f32.gmra.mxu0 %v380
        %v399 = vpop.f32.mrf.mxu0
        %v400 = vadd.f32 0.0, %v399
        %401 = vdwg.mxu0
        %v403 = vsel %vm378, %v368, 0
        %405 = vmatpush.msra.mxu0 0.0
        %406 = vmatpush.msra.mxu0 0.0
        %407 = vmatpush.msra.mxu0 0.0
        %408 = vmatpush.msra.mxu0 0.0
        %409 = vmatpush.msra.mxu0 0.0
        %410 = vmatpush.msra.mxu0 0.0
        %411 = vmatpush.msra.mxu0 0.0
        %412 = vmatpush.msra.mxu0 0.0
        %413 = vmatpush.msra.mxu0 0.0
        %414 = vmatpush.msra.mxu0 0.0
        %415 = vmatpush.msra.mxu0 0.0
        %416 = vmatpush.msra.mxu0 0.0
        %417 = vmatpush.msra.mxu0 %v372
        %418 = vmatpush.msra.mxu0 %v371
        %419 = vmatpush.msra.mxu0 %v370
        %420 = vmatpush.msra.mxu0 %v369
        %421 = vmatmul.f32.gmra.mxu0 %v403
        %v422 = vpop.f32.mrf.mxu0
        %v423 = vadd.f32 %v400, %v422
        %424 = vdwg.mxu0
        %v425 = vld [vmem:[%s4] sm:$0x1]
        %v427 = vperm.slane %v425, 0
        %v429 = vadd.f32 %v423, %v427
        %v430 = vmax.f32 %v429, 0.0
        %v431 = vld [vmem:[%s5] sm:$0x1]
        %s432 = sld [smem:[#allocation2]]
        %v433 = vstv %s432
        %v435 = vsel %vm378, %v431, 0
        %v438 = vsel %vm378, %v430, 0
        %440 = vmatpush.xpose.msra.mxu0 0.0
        %441 = vmatpush.xpose.msra.mxu0 0.0
        %442 = vmatpush.xpose.msra.mxu0 0.0
        %443 = vmatpush.xpose.msra.mxu0 0.0
        %444 = vmatpush.xpose.msra.mxu0 0.0
        %445 = vmatpush.xpose.msra.mxu0 0.0
        %446 = vmatpush.xpose.msra.mxu0 0.0
        %447 = vmatpush.xpose.msra.mxu0 0.0
        %448 = vmatpush.xpose.msra.mxu0 0.0
        %449 = vmatpush.xpose.msra.mxu0 0.0
        %450 = vmatpush.xpose.msra.mxu0 0.0
        %451 = vmatpush.xpose.msra.mxu0 0.0
        %452 = vmatpush.xpose.msra.mxu0 0.0
        %453 = vmatpush.xpose.msra.mxu0 0.0
        %454 = vmatpush.xpose.msra.mxu0 0.0
        %455 = vmatpush.xpose.msra.mxu0 %v438
        %456 = vmatmul.f32.gmra.mxu0 %v435
        %v457 = vpop.f32.mrf.mxu0
        %v458 = vadd.f32 %v433, %v457
        %459 = vdwg.mxu0
        %vm460 = vcmask 57344
        %461 = vst.msk [vmem:[%s367] sm:$0x1] %vm460, %v458
        %s462 = sand.u32 %s194, 1
        %s463 = scalar_lea.sflag [#allocation5], %s462
        %s464 = sand.u32 %s194, 1
        %s465 = scalar_lea.vmem [#allocation11], %s464
        // Predicated region
        $region65: #{tpu_custom_call.1} parent=47 // pred_check
          %p466 = pneg %p204
        $region66: #{tpu_custom_call.1} parent=47 // pred_check_branch
          %468 = sbr.rel (%p466) target = $region68
        $region67: #{tpu_custom_call.1} parent=47 // pred_region
          %470 = vsyncadd %s463, 0
          %s471 = scalar_lea.hbm %s7, %s29
          %s473 = sshll.u32 %s465, 4
          %s474 = int_to_ptr.vmem [resolvable:$true] %s473
          %s475 = sshll.u32 %s471, 4
          %s476 = int_to_ptr.hbm [resolvable:$true] %s475
          %478 = dma.vmem_to_hbm [thread:$0]  %s474, 16, %s476, %s463
        $region68: #{tpu_custom_call.1} parent=47 // pred_fallthru
          _
      $region48: #{tpu_custom_call.1} parent=5 // pred_fallthru
        _
      %p479 = scmp.le.s32.totalorder 2, %s24
      // Predicated region
      $region69: #{tpu_custom_call.1} parent=5 // pred_check
        %p480 = pneg %p479
      $region70: #{tpu_custom_call.1} parent=5 // pred_check_branch
        %482 = sbr.rel (%p480) target = $region72
      $region71: #{tpu_custom_call.1} parent=5 // pred_region
        %s483 = ssub.s32 %s24, 2
        // Predicated region
        $region73: #{tpu_custom_call.1} parent=71 // pred_check
          %p484 = pneg %p210
        $region74: #{tpu_custom_call.1} parent=71 // pred_check_branch
          %486 = sbr.rel (%p484) target = $region76
        $region75: #{tpu_custom_call.1} parent=71 // pred_region
          %s487 = sand.u32 %s195, 1
          %s488 = scalar_lea.sflag [#allocation5], %s487
          %s489 = sand.u32 %s195, 1
          %s490 = scalar_lea.vmem [#allocation11], %s489
          %492 = dma.done %s488, 16
        $region76: #{tpu_custom_call.1} parent=71 // pred_fallthru
          _
      $region72: #{tpu_custom_call.1} parent=5 // pred_fallthru
        _
    $region6: #{tpu_custom_call.1} parent=1 // loop_footer
      %s28 = sadd.s32 1, %s24
    $region7: #{tpu_custom_call.1} parent=1 // loop_footer_branch
      %23 = sbr.rel target = $region3
    $region8: #{tpu_custom_call.1} parent=1 // loop_exit
      _
    %493 = vsyncpa [#allocation4], 1
    %s494 = scalar_lea.sflag [#allocation4], 1
    %495 = vsyncpa %s494, 1
    %496 = vsyncpa [#allocation7], 1
    %s497 = scalar_lea.sflag [#allocation7], 1
    %498 = vsyncpa %s497, 1
    %499 = vsyncpa [#allocation10], 1
    %500 = vsyncpa [#allocation5], 1
    %s501 = scalar_lea.sflag [#allocation5], 1
    %502 = vsyncpa %s501, 1

</llo_original>
